<compile_context>
chip_gen: v6e
topology: v6e:2x2x1
jax: 0.10.0
libtpu: 0.0.40
codegen_flags: <defaults>
</compile_context>

<pallas_src>
import jax
import jax.numpy as jnp
from jax.experimental import pallas as pl
from jax.experimental.pallas import tpu as pltpu

_SUBLANE = 16  # batch tiles kept a multiple of 16 (covers f32 (8) and bf16 (16) packing)


def _round_up(x, m):
    return (x + m - 1) // m * m


def _mlp_kernel(x_ref, w1_ref, b1_ref, w2_ref, b2_ref, w3_ref, b3_ref, o_ref):
    # Layer 1: Linear (f32 x f32, f32 accumulate) + bias + ReLU
    h = jnp.dot(x_ref[...], w1_ref[...], preferred_element_type=jnp.float32)
    h = jnp.maximum(h + b1_ref[...], 0.0)
    # Layer 2: Linear + bias + ReLU
    h = jnp.dot(h, w2_ref[...], preferred_element_type=jnp.float32)
    h = jnp.maximum(h + b2_ref[...], 0.0)
    # Output layer: Linear + bias, Identity output activation.
    q = jnp.dot(h, w3_ref[...], preferred_element_type=jnp.float32)
    o_ref[...] = (q + b3_ref[...]).astype(o_ref.dtype)


def action_value_dis_forward(obs, params, *, block_b=512):
    """ActionValueDis.forward: obs [B, obs_dim] -> Q-values [B, act_num] (f32)."""
    w1, b1, w2, b2, w3, b3 = params
    B, obs_dim = obs.shape
    h1 = w1.shape[1]
    h2 = w2.shape[1]
    act_num = w3.shape[1]

    # ---- Batch tile choice ------------------------------------------------
    #  * multiple of 16 sublanes, at most block_b (default 512 amortizes the
    #    ~0.35 us per-grid-step overhead),
    #  * capped at ceil(B/2) so the grid has >= 2 steps and the batch tiles can
    #    shard across both v7x TensorCores (no-op on single-TC v5e/v6e).
    bb = block_b
    if B > _SUBLANE:
        bb = min(bb, _round_up(-(-B // 2), _SUBLANE))
    bb = min(bb, _round_up(B, _SUBLANE))
    bb = max(_SUBLANE, _round_up(bb, _SUBLANE))

    B_pad = _round_up(B, bb)
    if B_pad != B:
        obs = jnp.pad(obs, ((0, B_pad - B), (0, 0)))  # zero rows, sliced off below
    grid = (B_pad // bb,)

    obs = obs.astype(jnp.float32)

    def const_spec(shape):
        # Full-array block with a constant index map: fetched once, VMEM-resident.
        return pl.BlockSpec(shape, lambda i: (0, 0))

    out = pl.pallas_call(
        _mlp_kernel,
        out_shape=jax.ShapeDtypeStruct((B_pad, act_num), jnp.float32),
        grid_spec=pltpu.PrefetchScalarGridSpec(
            num_scalar_prefetch=0,
            grid=grid,
            in_specs=[
                pl.BlockSpec((bb, obs_dim), lambda i: (i, 0)),  # obs batch tile
                const_spec((obs_dim, h1)),
                const_spec((1, h1)),
                const_spec((h1, h2)),
                const_spec((1, h2)),
                const_spec((h2, act_num)),
                const_spec((1, act_num)),
            ],
            # Narrow output: last block dim == full array dim (act_num) -> legal,
            # no lane padding, no follow-up slice pass over a padded array.
            out_specs=pl.BlockSpec((bb, act_num), lambda i: (i, 0)),
        ),
        compiler_params=pltpu.CompilerParams(
            dimension_semantics=("parallel",),
        ),
    )(obs, w1, b1, w2, b2, w3, b3)

    return out if B_pad == B else out[:B]


def init_params(key, obs_dim, hidden_sizes, act_num):
    """Deterministic init mimicking torch.nn.Linear default (uniform +/- 1/sqrt(fan_in))."""
    sizes = [obs_dim] + list(hidden_sizes) + [act_num]
    params = []
    for j in range(len(sizes) - 1):
        fan_in, fan_out = sizes[j], sizes[j + 1]
        key, kw, kb = jax.random.split(key, 3)
        bound = 1.0 / jnp.sqrt(fan_in)
        # Stored as [in, out] so the kernel computes x @ W (PyTorch stores [out, in]).
        w = jax.random.uniform(kw, (fan_in, fan_out), jnp.float32, -bound, bound)
        b = jax.random.uniform(kb, (1, fan_out), jnp.float32, -bound, bound)
        params += [w, b]
    return tuple(params)


def _reference_forward(obs, params):
    """Pure-JAX f32 reference (highest matmul precision)."""
    w1, b1, w2, b2, w3, b3 = params
    hp = jax.lax.Precision.HIGHEST
    h = jnp.maximum(jnp.dot(obs, w1, precision=hp) + b1, 0.0)
    h = jnp.maximum(jnp.dot(h, w2, precision=hp) + b2, 0.0)
    return jnp.dot(h, w3, precision=hp) + b3


if __name__ == "__main__":
    # Small shapes consistent with ActionValueDis:
    #   obs_dim=16, hidden_sizes=(64, 64), act_num=8.
    # batch=500 exercises ragged-batch padding and yields a 2-step parallel grid
    # (block_b capped at ceil(500/2) -> 256, B_pad=512).
    batch, obs_dim, act_num = 500, 16, 8
    hidden_sizes = (64, 64)

    key = jax.random.PRNGKey(0)
    key, k_obs = jax.random.split(key)
    obs = jax.random.normal(k_obs, (batch, obs_dim), dtype=jnp.float32)
    params = init_params(key, obs_dim, hidden_sizes, act_num)

    q = action_value_dis_forward(obs, params)
    q = jax.block_until_ready(q)
    assert q.shape == (batch, act_num)

    # Check vs. an f32 reference. Tolerance is loose enough to cover whatever
    # MXU pass decomposition the compiler picks for the f32 matmuls, tight
    # enough to catch real bugs (Q values are O(1)).
    q_ref = _reference_forward(obs, params)
    assert jnp.allclose(q, q_ref, atol=2e-2, rtol=2e-2), \
        float(jnp.max(jnp.abs(q - q_ref)))

    # TODO(synk): get_q's per-sample gather of the chosen action is left to the
    # caller (jnp.take_along_axis on the returned Q table); only forward() is fused.
    print("KERNEL_OK")
</pallas_src>

<mosaic_0001>
module attributes {stable_mosaic.version = 11 : i64} {
  func.func @_mlp_kernel(%arg0: i32, %arg1: memref<256x16xf32, #tpu.memory_space<vmem>>, %arg2: memref<16x64xf32, #tpu.memory_space<vmem>>, %arg3: memref<1x64xf32, #tpu.memory_space<vmem>>, %arg4: memref<64x64xf32, #tpu.memory_space<vmem>>, %arg5: memref<1x64xf32, #tpu.memory_space<vmem>>, %arg6: memref<64x8xf32, #tpu.memory_space<vmem>>, %arg7: memref<1x8xf32, #tpu.memory_space<vmem>>, %arg8: memref<256x8xf32, #tpu.memory_space<vmem>>) attributes {dimension_semantics = [#tpu.dimension_semantics<parallel>], iteration_bounds = array<i64: 2>, scalar_prefetch = 0 : i64, scratch_operands = 0 : i64, tpu.core_type = #tpu.core_type<tc>, window_params = [{transform_indices = @transform_0, window_bounds = array<i64: 256, 16>}, {pipeline_mode = #tpu.pipeline_mode<synchronous>, transform_indices = @transform_1, window_bounds = array<i64: 16, 64>}, {pipeline_mode = #tpu.pipeline_mode<synchronous>, transform_indices = @transform_2, window_bounds = array<i64: 1, 64>}, {pipeline_mode = #tpu.pipeline_mode<synchronous>, transform_indices = @transform_3, window_bounds = array<i64: 64, 64>}, {pipeline_mode = #tpu.pipeline_mode<synchronous>, transform_indices = @transform_4, window_bounds = array<i64: 1, 64>}, {pipeline_mode = #tpu.pipeline_mode<synchronous>, transform_indices = @transform_5, window_bounds = array<i64: 64, 8>}, {pipeline_mode = #tpu.pipeline_mode<synchronous>, transform_indices = @transform_6, window_bounds = array<i64: 1, 8>}, {transform_indices = @transform_7, window_bounds = array<i64: 256, 8>}]} {
    %c0 = arith.constant 0 : index
    %c0_0 = arith.constant 0 : index
    %0 = vector.load %arg1[%c0, %c0_0] : memref<256x16xf32, #tpu.memory_space<vmem>>, vector<256x16xf32>
    %c0_1 = arith.constant 0 : index
    %c0_2 = arith.constant 0 : index
    %1 = vector.load %arg2[%c0_1, %c0_2] : memref<16x64xf32, #tpu.memory_space<vmem>>, vector<16x64xf32>
    %cst = arith.constant dense<0.000000e+00> : vector<256x64xf32>
    %2 = tpu.matmul %0, %1, %cst {dimension_numbers = #tpu.dot_dimension_numbers<[1], [0], [0], [1], [0, 0, 1, 1], [], []>} : vector<256x16xf32>, vector<16x64xf32>, vector<256x64xf32> -> vector<256x64xf32>
    %c0_3 = arith.constant 0 : index
    %c0_4 = arith.constant 0 : index
    %3 = vector.load %arg3[%c0_3, %c0_4] : memref<1x64xf32, #tpu.memory_space<vmem>>, vector<1x64xf32>
    %4 = vector.broadcast %3 : vector<1x64xf32> to vector<256x64xf32>
    %5 = arith.addf %2, %4 : vector<256x64xf32>
    %cst_5 = arith.constant 0.000000e+00 : f32
    %6 = vector.broadcast %cst_5 : f32 to vector<256x64xf32>
    %7 = arith.maximumf %5, %6 : vector<256x64xf32>
    %c0_6 = arith.constant 0 : index
    %c0_7 = arith.constant 0 : index
    %8 = vector.load %arg4[%c0_6, %c0_7] : memref<64x64xf32, #tpu.memory_space<vmem>>, vector<64x64xf32>
    %cst_8 = arith.constant dense<0.000000e+00> : vector<256x64xf32>
    %9 = tpu.matmul %7, %8, %cst_8 {dimension_numbers = #tpu.dot_dimension_numbers<[1], [0], [0], [1], [0, 0, 1, 1], [], []>} : vector<256x64xf32>, vector<64x64xf32>, vector<256x64xf32> -> vector<256x64xf32>
    %c0_9 = arith.constant 0 : index
    %c0_10 = arith.constant 0 : index
    %10 = vector.load %arg5[%c0_9, %c0_10] : memref<1x64xf32, #tpu.memory_space<vmem>>, vector<1x64xf32>
    %11 = vector.broadcast %10 : vector<1x64xf32> to vector<256x64xf32>
    %12 = arith.addf %9, %11 : vector<256x64xf32>
    %cst_11 = arith.constant 0.000000e+00 : f32
    %13 = vector.broadcast %cst_11 : f32 to vector<256x64xf32>
    %14 = arith.maximumf %12, %13 : vector<256x64xf32>
    %c0_12 = arith.constant 0 : index
    %c0_13 = arith.constant 0 : index
    %15 = vector.load %arg6[%c0_12, %c0_13] : memref<64x8xf32, #tpu.memory_space<vmem>>, vector<64x8xf32>
    %cst_14 = arith.constant dense<0.000000e+00> : vector<256x8xf32>
    %16 = tpu.matmul %14, %15, %cst_14 {dimension_numbers = #tpu.dot_dimension_numbers<[1], [0], [0], [1], [0, 0, 1, 1], [], []>} : vector<256x64xf32>, vector<64x8xf32>, vector<256x8xf32> -> vector<256x8xf32>
    %c0_15 = arith.constant 0 : index
    %c0_16 = arith.constant 0 : index
    %17 = vector.load %arg7[%c0_15, %c0_16] : memref<1x8xf32, #tpu.memory_space<vmem>>, vector<1x8xf32>
    %18 = vector.broadcast %17 : vector<1x8xf32> to vector<256x8xf32>
    %19 = arith.addf %16, %18 : vector<256x8xf32>
    %c0_17 = arith.constant 0 : index
    %c0_18 = arith.constant 0 : index
    %20 = vector.load %arg8[%c0_17, %c0_18] : memref<256x8xf32, #tpu.memory_space<vmem>>, vector<256x8xf32>
    tpu.vector_store %arg8[%c0_17, %c0_18], %19 {strides = array<i32>} : memref<256x8xf32, #tpu.memory_space<vmem>>, vector<256x8xf32>,
    return
  }
  func.func @transform_0(%arg0: i32) -> (i32, i32) {
    %c0_i32 = arith.constant 0 : i32
    %c0_i32_0 = arith.constant 0 : i32
    return %arg0, %c0_i32 : i32, i32
  }
  func.func @transform_1(%arg0: i32) -> (i32, i32) {
    %c0_i32 = arith.constant 0 : i32
    %c0_i32_0 = arith.constant 0 : i32
    %c0_i32_1 = arith.constant 0 : i32
    return %c0_i32, %c0_i32_0 : i32, i32
  }
  func.func @transform_2(%arg0: i32) -> (i32, i32) {
    %c0_i32 = arith.constant 0 : i32
    %c0_i32_0 = arith.constant 0 : i32
    %c0_i32_1 = arith.constant 0 : i32
    return %c0_i32, %c0_i32_0 : i32, i32
  }
  func.func @transform_3(%arg0: i32) -> (i32, i32) {
    %c0_i32 = arith.constant 0 : i32
    %c0_i32_0 = arith.constant 0 : i32
    %c0_i32_1 = arith.constant 0 : i32
    return %c0_i32, %c0_i32_0 : i32, i32
  }
  func.func @transform_4(%arg0: i32) -> (i32, i32) {
    %c0_i32 = arith.constant 0 : i32
    %c0_i32_0 = arith.constant 0 : i32
    %c0_i32_1 = arith.constant 0 : i32
    return %c0_i32, %c0_i32_0 : i32, i32
  }
  func.func @transform_5(%arg0: i32) -> (i32, i32) {
    %c0_i32 = arith.constant 0 : i32
    %c0_i32_0 = arith.constant 0 : i32
    %c0_i32_1 = arith.constant 0 : i32
    return %c0_i32, %c0_i32_0 : i32, i32
  }
  func.func @transform_6(%arg0: i32) -> (i32, i32) {
    %c0_i32 = arith.constant 0 : i32
    %c0_i32_0 = arith.constant 0 : i32
    %c0_i32_1 = arith.constant 0 : i32
    return %c0_i32, %c0_i32_0 : i32, i32
  }
  func.func @transform_7(%arg0: i32) -> (i32, i32) {
    %c0_i32 = arith.constant 0 : i32
    %c0_i32_0 = arith.constant 0 : i32
    return %arg0, %c0_i32 : i32, i32
  }
}

</mosaic_0001>

<llo_original>
// kernel: tpu_custom_call.1
$region0: #{tpu_custom_call.1}
  #allocation0 [shape = 'u32[]', space=smem, size = 0x4, offset = 0x4, fixed_abs, tag = 'smem constant byte address 0x4 - core index']
  #allocation1 [shape = 'u32[144,128]{1,0:T(1,128)}', space=vmem, size = 0x12000, scoped, tag = 'internal scratch']
  %s0 = inlined_call_operand.vmem [shape: f32[512,16], index: 0, kind: input, shape index: {}]
  %s1 = inlined_call_operand.vmem [shape: f32[16,64], index: 1, kind: input, shape index: {}]
  %s2 = inlined_call_operand.vmem [shape: f32[1,64], index: 2, kind: input, shape index: {}]
  %s3 = inlined_call_operand.vmem [shape: f32[64,64], index: 3, kind: input, shape index: {}]
  %s4 = inlined_call_operand.vmem [shape: f32[1,64], index: 4, kind: input, shape index: {}]
  %s5 = inlined_call_operand.vmem [shape: f32[64,8], index: 5, kind: input, shape index: {}]
  %s6 = inlined_call_operand.vmem [shape: f32[1,8], index: 6, kind: input, shape index: {}]
  %s7 = inlined_call_operand.vmem [shape: f32[512,8], index: 7, kind: output, shape index: {}]
  %s8 = sld [smem:[#allocation0]]
  $region61: #{tpu_custom_call.1} parent=0
    _
  %s10 = ssub.s32 1, %s8
  %s11 = scalar_select 0, %s10, %s8
  loop: start=0, step=1, limit=4
  $region2: #{tpu_custom_call.1} parent=0 // loop_pre_header
    _
  $region3: #{tpu_custom_call.1} parent=0 // loop_header
    %s13 = sphi 0, %s17
    %p14 = scmp.ge.s32.totalorder %s13, 4
    %s23 = sphi 0, %s25
    %s26 = sphi 0, %s23
    %s27 = sphi 0, %s26
    %s43 = sphi 0, %s27
    %s47 = sphi 0, %s47
    %s49 = sphi 0, %s47
    %s50 = sphi 0, %s49
    %s64 = sphi 0, %s50
    %s68 = sphi 0, %s68
    %s70 = sphi 0, %s68
    %s71 = sphi 0, %s70
    %s85 = sphi 0, %s71
    %s89 = sphi 0, %s89
    %s91 = sphi 0, %s89
    %s92 = sphi 0, %s91
    %s106 = sphi 0, %s92
    %s110 = sphi 0, %s110
    %s112 = sphi 0, %s110
    %s113 = sphi 0, %s112
    %s127 = sphi 0, %s113
    %s131 = sphi 0, %s131
    %s133 = sphi 0, %s131
    %s134 = sphi 0, %s133
    %s148 = sphi 0, %s134
    %s152 = sphi 0, %s152
    %s154 = sphi 0, %s152
    %s155 = sphi 0, %s154
    %s169 = sphi 0, %s155
    %s175 = sphi 0, %s177
    %s178 = sphi 0, %s175
    %s179 = sphi 0, %s178
    %s195 = sphi 0, %s179
  $region4: #{tpu_custom_call.1} parent=0 // loop_header_branch
    %16 = sbr.rel (%p14) target = $region8
  $region5: #{tpu_custom_call.1} parent=0 // loop_body
    %s18 = ssub.s32 %s13, 1
    %s19 = ssub.s32 %s13, 2
    %s20 = sadd.s32 %s13, 1
    %s21 = ssub.s32 %s13, %s20
    %p22 = scmp.eq.s32.totalorder %s21, 0
    %s24 = sadd.s32 %s23, 1
    %s25 = scalar_select %p22, %s23, %s24
    %p28 = pneg %p22
    %p29 = scmp.eq.s32.totalorder %s13, 1
    %p30 = por %p28, %p29
    %p31 = scmp.ne.s32.totalorder %s23, %s26
    %p32 = scmp.eq.s32.totalorder %s13, 0
    %p33 = por %p31, %p32
    %p34 = scmp.ne.s32.totalorder %s23, %s26
    %p35 = scmp.eq.s32.totalorder %s18, 1
    %p36 = por %p34, %p35
    %p37 = scmp.ne.s32.totalorder %s26, %s27
    %p38 = scmp.eq.s32.totalorder %s18, 0
    %p39 = por %p37, %p38
    %p40 = scmp.ne.s32.totalorder %s26, %s27
    %p41 = scmp.eq.s32.totalorder %s19, 1
    %p42 = por %p40, %p41
    %p44 = scmp.ne.s32.totalorder %s27, %s43
    %p45 = scmp.eq.s32.totalorder %s19, 0
    %p46 = por %p44, %p45
    %s48 = sadd.s32 %s47, 1
    %p51 = scmp.eq.s32.totalorder %s13, 1
    %p52 = scmp.ne.s32.totalorder %s47, %s49
    %p53 = scmp.eq.s32.totalorder %s13, 0
    %p54 = por %p52, %p53
    %p55 = scmp.ne.s32.totalorder %s47, %s49
    %p56 = scmp.eq.s32.totalorder %s18, 1
    %p57 = por %p55, %p56
    %p58 = scmp.ne.s32.totalorder %s49, %s50
    %p59 = scmp.eq.s32.totalorder %s18, 0
    %p60 = por %p58, %p59
    %p61 = scmp.ne.s32.totalorder %s49, %s50
    %p62 = scmp.eq.s32.totalorder %s19, 1
    %p63 = por %p61, %p62
    %p65 = scmp.ne.s32.totalorder %s50, %s64
    %p66 = scmp.eq.s32.totalorder %s19, 0
    %p67 = por %p65, %p66
    %s69 = sadd.s32 %s68, 1
    %p72 = scmp.eq.s32.totalorder %s13, 1
    %p73 = scmp.ne.s32.totalorder %s68, %s70
    %p74 = scmp.eq.s32.totalorder %s13, 0
    %p75 = por %p73, %p74
    %p76 = scmp.ne.s32.totalorder %s68, %s70
    %p77 = scmp.eq.s32.totalorder %s18, 1
    %p78 = por %p76, %p77
    %p79 = scmp.ne.s32.totalorder %s70, %s71
    %p80 = scmp.eq.s32.totalorder %s18, 0
    %p81 = por %p79, %p80
    %p82 = scmp.ne.s32.totalorder %s70, %s71
    %p83 = scmp.eq.s32.totalorder %s19, 1
    %p84 = por %p82, %p83
    %p86 = scmp.ne.s32.totalorder %s71, %s85
    %p87 = scmp.eq.s32.totalorder %s19, 0
    %p88 = por %p86, %p87
    %s90 = sadd.s32 %s89, 1
    %p93 = scmp.eq.s32.totalorder %s13, 1
    %p94 = scmp.ne.s32.totalorder %s89, %s91
    %p95 = scmp.eq.s32.totalorder %s13, 0
    %p96 = por %p94, %p95
    %p97 = scmp.ne.s32.totalorder %s89, %s91
    %p98 = scmp.eq.s32.totalorder %s18, 1
    %p99 = por %p97, %p98
    %p100 = scmp.ne.s32.totalorder %s91, %s92
    %p101 = scmp.eq.s32.totalorder %s18, 0
    %p102 = por %p100, %p101
    %p103 = scmp.ne.s32.totalorder %s91, %s92
    %p104 = scmp.eq.s32.totalorder %s19, 1
    %p105 = por %p103, %p104
    %p107 = scmp.ne.s32.totalorder %s92, %s106
    %p108 = scmp.eq.s32.totalorder %s19, 0
    %p109 = por %p107, %p108
    %s111 = sadd.s32 %s110, 1
    %p114 = scmp.eq.s32.totalorder %s13, 1
    %p115 = scmp.ne.s32.totalorder %s110, %s112
    %p116 = scmp.eq.s32.totalorder %s13, 0
    %p117 = por %p115, %p116
    %p118 = scmp.ne.s32.totalorder %s110, %s112
    %p119 = scmp.eq.s32.totalorder %s18, 1
    %p120 = por %p118, %p119
    %p121 = scmp.ne.s32.totalorder %s112, %s113
    %p122 = scmp.eq.s32.totalorder %s18, 0
    %p123 = por %p121, %p122
    %p124 = scmp.ne.s32.totalorder %s112, %s113
    %p125 = scmp.eq.s32.totalorder %s19, 1
    %p126 = por %p124, %p125
    %p128 = scmp.ne.s32.totalorder %s113, %s127
    %p129 = scmp.eq.s32.totalorder %s19, 0
    %p130 = por %p128, %p129
    %s132 = sadd.s32 %s131, 1
    %p135 = scmp.eq.s32.totalorder %s13, 1
    %p136 = scmp.ne.s32.totalorder %s131, %s133
    %p137 = scmp.eq.s32.totalorder %s13, 0
    %p138 = por %p136, %p137
    %p139 = scmp.ne.s32.totalorder %s131, %s133
    %p140 = scmp.eq.s32.totalorder %s18, 1
    %p141 = por %p139, %p140
    %p142 = scmp.ne.s32.totalorder %s133, %s134
    %p143 = scmp.eq.s32.totalorder %s18, 0
    %p144 = por %p142, %p143
    %p145 = scmp.ne.s32.totalorder %s133, %s134
    %p146 = scmp.eq.s32.totalorder %s19, 1
    %p147 = por %p145, %p146
    %p149 = scmp.ne.s32.totalorder %s134, %s148
    %p150 = scmp.eq.s32.totalorder %s19, 0
    %p151 = por %p149, %p150
    %s153 = sadd.s32 %s152, 1
    %p156 = scmp.eq.s32.totalorder %s13, 1
    %p157 = scmp.ne.s32.totalorder %s152, %s154
    %p158 = scmp.eq.s32.totalorder %s13, 0
    %p159 = por %p157, %p158
    %p160 = scmp.ne.s32.totalorder %s152, %s154
    %p161 = scmp.eq.s32.totalorder %s18, 1
    %p162 = por %p160, %p161
    %p163 = scmp.ne.s32.totalorder %s154, %s155
    %p164 = scmp.eq.s32.totalorder %s18, 0
    %p165 = por %p163, %p164
    %p166 = scmp.ne.s32.totalorder %s154, %s155
    %p167 = scmp.eq.s32.totalorder %s19, 1
    %p168 = por %p166, %p167
    %p170 = scmp.ne.s32.totalorder %s155, %s169
    %p171 = scmp.eq.s32.totalorder %s19, 0
    %p172 = por %p170, %p171
    %s173 = ssub.s32 %s13, %s20
    %p174 = scmp.eq.s32.totalorder %s173, 0
    %s176 = sadd.s32 %s175, 1
    %s177 = scalar_select %p174, %s175, %s176
    %p180 = pneg %p174
    %p181 = scmp.eq.s32.totalorder %s13, 1
    %p182 = por %p180, %p181
    %p183 = scmp.ne.s32.totalorder %s175, %s178
    %p184 = scmp.eq.s32.totalorder %s13, 0
    %p185 = por %p183, %p184
    %p186 = scmp.ne.s32.totalorder %s175, %s178
    %p187 = scmp.eq.s32.totalorder %s18, 1
    %p188 = por %p186, %p187
    %p189 = scmp.ne.s32.totalorder %s178, %s179
    %p190 = scmp.eq.s32.totalorder %s18, 0
    %p191 = por %p189, %p190
    %p192 = scmp.ne.s32.totalorder %s178, %s179
    %p193 = scmp.eq.s32.totalorder %s19, 1
    %p194 = por %p192, %p193
    %p196 = scmp.ne.s32.totalorder %s179, %s195
    %p197 = scmp.eq.s32.totalorder %s19, 0
    %p198 = por %p196, %p197
    %p199 = scmp.le.s32.totalorder 1, %s13
    %p200 = scmp.lt.s32.totalorder %s13, 3
    %p201 = pnand %p199, %p200
    %p202 = pneg %p201
    // Predicated region
    $region9: #{tpu_custom_call.1} parent=5 // pred_check
      _
    $region10: #{tpu_custom_call.1} parent=5 // pred_check_branch
      %204 = sbr.rel (%p201) target = $region12
    $region11: #{tpu_custom_call.1} parent=5 // pred_region
      %s205 = ssub.s32 %s13, 1
      // Predicated region
      $region13: #{tpu_custom_call.1} parent=11 // pred_check
        %p206 = pneg %p60
      $region14: #{tpu_custom_call.1} parent=11 // pred_check_branch
        %208 = sbr.rel (%p206) target = $region16
      $region15: #{tpu_custom_call.1} parent=11 // pred_region
        _
      $region16: #{tpu_custom_call.1} parent=11 // pred_fallthru
        _
      // Predicated region
      $region17: #{tpu_custom_call.1} parent=11 // pred_check
        %p209 = pneg %p81
      $region18: #{tpu_custom_call.1} parent=11 // pred_check_branch
        %211 = sbr.rel (%p209) target = $region20
      $region19: #{tpu_custom_call.1} parent=11 // pred_region
        _
      $region20: #{tpu_custom_call.1} parent=11 // pred_fallthru
        _
      // Predicated region
      $region21: #{tpu_custom_call.1} parent=11 // pred_check
        %p212 = pneg %p102
      $region22: #{tpu_custom_call.1} parent=11 // pred_check_branch
        %214 = sbr.rel (%p212) target = $region24
      $region23: #{tpu_custom_call.1} parent=11 // pred_region
        _
      $region24: #{tpu_custom_call.1} parent=11 // pred_fallthru
        _
      // Predicated region
      $region25: #{tpu_custom_call.1} parent=11 // pred_check
        %p215 = pneg %p123
      $region26: #{tpu_custom_call.1} parent=11 // pred_check_branch
        %217 = sbr.rel (%p215) target = $region28
      $region27: #{tpu_custom_call.1} parent=11 // pred_region
        _
      $region28: #{tpu_custom_call.1} parent=11 // pred_fallthru
        _
      // Predicated region
      $region29: #{tpu_custom_call.1} parent=11 // pred_check
        %p218 = pneg %p144
      $region30: #{tpu_custom_call.1} parent=11 // pred_check_branch
        %220 = sbr.rel (%p218) target = $region32
      $region31: #{tpu_custom_call.1} parent=11 // pred_region
        _
      $region32: #{tpu_custom_call.1} parent=11 // pred_fallthru
        _
      // Predicated region
      $region33: #{tpu_custom_call.1} parent=11 // pred_check
        %p221 = pneg %p165
      $region34: #{tpu_custom_call.1} parent=11 // pred_check_branch
        %223 = sbr.rel (%p221) target = $region36
      $region35: #{tpu_custom_call.1} parent=11 // pred_region
        _
      $region36: #{tpu_custom_call.1} parent=11 // pred_fallthru
        _
    $region12: #{tpu_custom_call.1} parent=5 // pred_fallthru
      _
    %p224 = scmp.lt.s32.totalorder %s13, 2
    // Predicated region
    $region37: #{tpu_custom_call.1} parent=5 // pred_check
      %p225 = pneg %p224
    $region38: #{tpu_custom_call.1} parent=5 // pred_check_branch
      %227 = sbr.rel (%p225) target = $region40
    $region39: #{tpu_custom_call.1} parent=5 // pred_region
      // Predicated region
      $region41: #{tpu_custom_call.1} parent=39 // pred_check
        %p228 = pneg %p33
      $region42: #{tpu_custom_call.1} parent=39 // pred_check_branch
        %230 = sbr.rel (%p228) target = $region44
      $region43: #{tpu_custom_call.1} parent=39 // pred_region
        %s231 = smul.u32 32, %s13
        %p232 = scmp.lt.s32.totalorder %s231, 63
        %s233 = scalar_select %p232, %s231, 63
        %s234 = smul.addr %s233, 8
        %s235 = scalar_lea.vmem %s0, %s234
        %s236 = smul.u32 32, %s13
      $region44: #{tpu_custom_call.1} parent=39 // pred_fallthru
        _
    $region40: #{tpu_custom_call.1} parent=5 // pred_fallthru
      _
    %p237 = scmp.le.s32.totalorder 1, %s13
    %p238 = scmp.lt.s32.totalorder %s13, 3
    %p239 = pnand %p237, %p238
    %p240 = pneg %p239
    // Predicated region
    $region45: #{tpu_custom_call.1} parent=5 // pred_check
      _
    $region46: #{tpu_custom_call.1} parent=5 // pred_check_branch
      %242 = sbr.rel (%p239) target = $region48
    $region47: #{tpu_custom_call.1} parent=5 // pred_region
      %s243 = ssub.s32 %s13, 1
      %s244 = smul.u32 32, %s18
      %p245 = scmp.lt.s32.totalorder %s244, 63
      %s246 = scalar_select %p245, %s244, 63
      %s247 = smul.addr %s246, 8
      %s248 = scalar_lea.vmem %s0, %s247
      %p249 = pneg %p39
      %p250 = pneg %p36
      %p251 = pneg %p60
      %p252 = pneg %p57
      %p253 = pneg %p81
      %p254 = pneg %p78
      %p255 = pneg %p102
      %p256 = pneg %p99
      %p257 = pneg %p123
      %p258 = pneg %p120
      %p259 = pneg %p144
      %p260 = pneg %p141
      %p261 = pneg %p165
      %p262 = pneg %p162
      %p263 = pneg %p191
      %p264 = pneg %p188
      %s265 = smul.u32 32, %s18
      %p266 = scmp.lt.s32.totalorder %s265, 63
      %s267 = scalar_select %p266, %s265, 63
      %s268 = smul.addr %s267, 8
      %s269 = scalar_lea.vmem %s7, %s268
      %s270 = smul.u32 32, %s18
      %p271 = scmp.lt.s32.totalorder %s270, 63
      %s272 = scalar_select %p271, %s270, 63
      %s273 = smul.addr %s272, 8
      %s274 = scalar_lea.vmem %s0, %s273
      %s275 = smul.u32 32, %s18
      %s276 = smul.u32 32, %s18
      %p277 = scmp.lt.s32.totalorder %s276, 63
      %s278 = scalar_select %p277, %s276, 63
      %s279 = smul.addr %s278, 8
      %s280 = scalar_lea.vmem %s7, %s279
      %s281 = smul.u32 32, %s18
      %v282 = vld [vmem:[%s274] sm:$0xff]
      %v283 = vld [vmem:[%s274 + $0x8] sm:$0xff]
      %v284 = vld [vmem:[%s274 + $0x10] sm:$0xff]
      %v285 = vld [vmem:[%s274 + $0x18] sm:$0xff]
      %v286 = vld [vmem:[%s274 + $0x20] sm:$0xff]
      %v287 = vld [vmem:[%s274 + $0x28] sm:$0xff]
      %v288 = vld [vmem:[%s274 + $0x30] sm:$0xff]
      %v289 = vld [vmem:[%s274 + $0x38] sm:$0xff]
      %v290 = vld [vmem:[%s274 + $0x40] sm:$0xff]
      %v291 = vld [vmem:[%s274 + $0x48] sm:$0xff]
      %v292 = vld [vmem:[%s274 + $0x50] sm:$0xff]
      %v293 = vld [vmem:[%s274 + $0x58] sm:$0xff]
      %v294 = vld [vmem:[%s274 + $0x60] sm:$0xff]
      %v295 = vld [vmem:[%s274 + $0x68] sm:$0xff]
      %v296 = vld [vmem:[%s274 + $0x70] sm:$0xff]
      %v297 = vld [vmem:[%s274 + $0x78] sm:$0xff]
      %v298 = vld [vmem:[%s274 + $0x80] sm:$0xff]
      %v299 = vld [vmem:[%s274 + $0x88] sm:$0xff]
      %v300 = vld [vmem:[%s274 + $0x90] sm:$0xff]
      %v301 = vld [vmem:[%s274 + $0x98] sm:$0xff]
      %v302 = vld [vmem:[%s274 + $0xa0] sm:$0xff]
      %v303 = vld [vmem:[%s274 + $0xa8] sm:$0xff]
      %v304 = vld [vmem:[%s274 + $0xb0] sm:$0xff]
      %v305 = vld [vmem:[%s274 + $0xb8] sm:$0xff]
      %v306 = vld [vmem:[%s274 + $0xc0] sm:$0xff]
      %v307 = vld [vmem:[%s274 + $0xc8] sm:$0xff]
      %v308 = vld [vmem:[%s274 + $0xd0] sm:$0xff]
      %v309 = vld [vmem:[%s274 + $0xd8] sm:$0xff]
      %v310 = vld [vmem:[%s274 + $0xe0] sm:$0xff]
      %v311 = vld [vmem:[%s274 + $0xe8] sm:$0xff]
      %v312 = vld [vmem:[%s274 + $0xf0] sm:$0xff]
      %v313 = vld [vmem:[%s274 + $0xf8] sm:$0xff]
      %v314 = vld [vmem:[%s1] sm:$0xff]
      %v315 = vld [vmem:[%s1 + $0x8] sm:$0xff]
      %v316 = vld [vmem:[%s2] sm:$0x1]
      %v318 = vlaneseq
      %v319 = vshrl.u32 %v318, 7
      %v320 = vsub.s32 0, %v319
      %v321 = vrot.slane %v316, %v320
      %vm323 = vcmask 130048
      %v325 = vsel %vm323, %v282, 0
      %v328 = vsel %vm323, %v283, 0
      %v331 = vsel %vm323, %v284, 0
      %v334 = vsel %vm323, %v285, 0
      %v337 = vsel %vm323, %v286, 0
      %v340 = vsel %vm323, %v287, 0
      %v343 = vsel %vm323, %v288, 0
      %v346 = vsel %vm323, %v289, 0
      %v349 = vsel %vm323, %v290, 0
      %v352 = vsel %vm323, %v291, 0
      %v355 = vsel %vm323, %v292, 0
      %v358 = vsel %vm323, %v293, 0
      %v361 = vsel %vm323, %v294, 0
      %v364 = vsel %vm323, %v295, 0
      %v367 = vsel %vm323, %v296, 0
      %v370 = vsel %vm323, %v297, 0
      %v373 = vsel %vm323, %v298, 0
      %v376 = vsel %vm323, %v299, 0
      %v379 = vsel %vm323, %v300, 0
      %v382 = vsel %vm323, %v301, 0
      %v385 = vsel %vm323, %v302, 0
      %v388 = vsel %vm323, %v303, 0
      %v391 = vsel %vm323, %v304, 0
      %v394 = vsel %vm323, %v305, 0
      %v397 = vsel %vm323, %v306, 0
      %v400 = vsel %vm323, %v307, 0
      %v403 = vsel %vm323, %v308, 0
      %v406 = vsel %vm323, %v309, 0
      %v409 = vsel %vm323, %v310, 0
      %v412 = vsel %vm323, %v311, 0
      %v415 = vsel %vm323, %v312, 0
      %v418 = vsel %vm323, %v313, 0
      %420 = vmatprep.subr.mxu0 0.0
      %421 = vmatpush1.msra.mxu0 0.0
      %422 = vmatprep.subr.mxu0 0.0
      %423 = vmatpush1.msra.mxu0 0.0
      %424 = vmatprep.subr.mxu0 0.0
      %425 = vmatpush1.msra.mxu0 0.0
      %426 = vmatprep.subr.mxu0 0.0
      %427 = vmatpush1.msra.mxu0 0.0
      %428 = vmatprep.subr.mxu0 0.0
      %429 = vmatpush1.msra.mxu0 0.0
      %430 = vmatprep.subr.mxu0 0.0
      %431 = vmatpush1.msra.mxu0 0.0
      %432 = vmatprep.subr.mxu0 0.0
      %433 = vmatpush1.msra.mxu0 0.0
      %434 = vmatprep.subr.mxu0 0.0
      %435 = vmatpush1.msra.mxu0 0.0
      %436 = vmatprep.subr.mxu0 0.0
      %437 = vmatpush1.msra.mxu0 0.0
      %438 = vmatprep.subr.mxu0 0.0
      %439 = vmatpush1.msra.mxu0 0.0
      %440 = vmatprep.subr.mxu0 0.0
      %441 = vmatpush1.msra.mxu0 0.0
      %442 = vmatprep.subr.mxu0 0.0
      %443 = vmatpush1.msra.mxu0 0.0
      %444 = vmatprep.subr.mxu0 0.0
      %445 = vmatpush1.msra.mxu0 0.0
      %446 = vmatprep.subr.mxu0 0.0
      %447 = vmatpush1.msra.mxu0 0.0
      %448 = vmatprep.subr.mxu0 0.0
      %449 = vmatpush1.msra.mxu0 %v315
      %450 = vmatprep.subr.mxu0 0.0
      %451 = vmatpush1.msra.mxu0 %v314
      %452 = vmatprep.subr.mxu0 0.0
      %453 = vmatpush2.msra.mxu0 0.0
      %454 = vmatprep.subr.mxu0 0.0
      %455 = vmatpush2.msra.mxu0 0.0
      %456 = vmatprep.subr.mxu0 0.0
      %457 = vmatpush2.msra.mxu0 0.0
      %458 = vmatprep.subr.mxu0 0.0
      %459 = vmatpush2.msra.mxu0 0.0
      %460 = vmatprep.subr.mxu0 0.0
      %461 = vmatpush2.msra.mxu0 0.0
      %462 = vmatprep.subr.mxu0 0.0
      %463 = vmatpush2.msra.mxu0 0.0
      %464 = vmatprep.subr.mxu0 0.0
      %465 = vmatpush2.msra.mxu0 0.0
      %466 = vmatprep.subr.mxu0 0.0
      %467 = vmatpush2.msra.mxu0 0.0
      %468 = vmatprep.subr.mxu0 0.0
      %469 = vmatpush2.msra.mxu0 0.0
      %470 = vmatprep.subr.mxu0 0.0
      %471 = vmatpush2.msra.mxu0 0.0
      %472 = vmatprep.subr.mxu0 0.0
      %473 = vmatpush2.msra.mxu0 0.0
      %474 = vmatprep.subr.mxu0 0.0
      %475 = vmatpush2.msra.mxu0 0.0
      %476 = vmatprep.subr.mxu0 0.0
      %477 = vmatpush2.msra.mxu0 0.0
      %478 = vmatprep.subr.mxu0 0.0
      %479 = vmatpush2.msra.mxu0 0.0
      %480 = vmatprep.subr.mxu0 0.0
      %481 = vmatpush2.msra.mxu0 0.0
      %482 = vmatprep.subr.mxu0 0.0
      %483 = vmatpush2.msra.mxu0 0.0
      %484 = vmatprep.mubr.f32.mxu0 0.0
      %485 = vmatmul.mubr.f32.gmra.mxu0 %v325
      %v486 = vpop.f32.mrf.mxu0
      %v487 = vadd.f32 %v321, %v486
      %v488 = vpop.f32.mrf.mxu0
      %489 = vmatprep.mubr.f32.mxu0 0.0
      %490 = vmatmul.mubr.f32.gmra.mxu0 %v328
      %v491 = vpop.f32.mrf.mxu0
      %v492 = vadd.f32 %v321, %v491
      %v493 = vpop.f32.mrf.mxu0
      %494 = vmatprep.mubr.f32.mxu0 0.0
      %495 = vmatmul.mubr.f32.gmra.mxu0 %v331
      %v496 = vpop.f32.mrf.mxu0
      %v497 = vadd.f32 %v321, %v496
      %v498 = vpop.f32.mrf.mxu0
      %499 = vmatprep.mubr.f32.mxu0 0.0
      %500 = vmatmul.mubr.f32.gmra.mxu0 %v334
      %v501 = vpop.f32.mrf.mxu0
      %v502 = vadd.f32 %v321, %v501
      %v503 = vpop.f32.mrf.mxu0
      %504 = vmatprep.mubr.f32.mxu0 0.0
      %505 = vmatmul.mubr.f32.gmra.mxu0 %v337
      %v506 = vpop.f32.mrf.mxu0
      %v507 = vadd.f32 %v321, %v506
      %v508 = vpop.f32.mrf.mxu0
      %509 = vmatprep.mubr.f32.mxu0 0.0
      %510 = vmatmul.mubr.f32.gmra.mxu0 %v340
      %v511 = vpop.f32.mrf.mxu0
      %v512 = vadd.f32 %v321, %v511
      %v513 = vpop.f32.mrf.mxu0
      %514 = vmatprep.mubr.f32.mxu0 0.0
      %515 = vmatmul.mubr.f32.gmra.mxu0 %v343
      %v516 = vpop.f32.mrf.mxu0
      %v517 = vadd.f32 %v321, %v516
      %v518 = vpop.f32.mrf.mxu0
      %519 = vmatprep.mubr.f32.mxu0 0.0
      %520 = vmatmul.mubr.f32.gmra.mxu0 %v346
      %v521 = vpop.f32.mrf.mxu0
      %v522 = vadd.f32 %v321, %v521
      %v523 = vpop.f32.mrf.mxu0
      %524 = vmatprep.mubr.f32.mxu0 0.0
      %525 = vmatmul.mubr.f32.gmra.mxu0 %v349
      %v526 = vpop.f32.mrf.mxu0
      %v527 = vadd.f32 %v321, %v526
      %v528 = vpop.f32.mrf.mxu0
      %529 = vmatprep.mubr.f32.mxu0 0.0
      %530 = vmatmul.mubr.f32.gmra.mxu0 %v352
      %v531 = vpop.f32.mrf.mxu0
      %v532 = vadd.f32 %v321, %v531
      %v533 = vpop.f32.mrf.mxu0
      %534 = vmatprep.mubr.f32.mxu0 0.0
      %535 = vmatmul.mubr.f32.gmra.mxu0 %v355
      %v536 = vpop.f32.mrf.mxu0
      %v537 = vadd.f32 %v321, %v536
      %v538 = vpop.f32.mrf.mxu0
      %539 = vmatprep.mubr.f32.mxu0 0.0
      %540 = vmatmul.mubr.f32.gmra.mxu0 %v358
      %v541 = vpop.f32.mrf.mxu0
      %v542 = vadd.f32 %v321, %v541
      %v543 = vpop.f32.mrf.mxu0
      %544 = vmatprep.mubr.f32.mxu0 0.0
      %545 = vmatmul.mubr.f32.gmra.mxu0 %v361
      %v546 = vpop.f32.mrf.mxu0
      %v547 = vadd.f32 %v321, %v546
      %v548 = vpop.f32.mrf.mxu0
      %549 = vmatprep.mubr.f32.mxu0 0.0
      %550 = vmatmul.mubr.f32.gmra.mxu0 %v364
      %v551 = vpop.f32.mrf.mxu0
      %v552 = vadd.f32 %v321, %v551
      %v553 = vpop.f32.mrf.mxu0
      %554 = vmatprep.mubr.f32.mxu0 0.0
      %555 = vmatmul.mubr.f32.gmra.mxu0 %v367
      %v556 = vpop.f32.mrf.mxu0
      %v557 = vadd.f32 %v321, %v556
      %v558 = vpop.f32.mrf.mxu0
      %559 = vmatprep.mubr.f32.mxu0 0.0
      %560 = vmatmul.mubr.f32.gmra.mxu0 %v370
      %v561 = vpop.f32.mrf.mxu0
      %v562 = vadd.f32 %v321, %v561
      %v563 = vpop.f32.mrf.mxu0
      %564 = vmatprep.mubr.f32.mxu0 0.0
      %565 = vmatmul.mubr.f32.gmra.mxu0 %v373
      %v566 = vpop.f32.mrf.mxu0
      %v567 = vadd.f32 %v321, %v566
      %v568 = vpop.f32.mrf.mxu0
      %569 = vmatprep.mubr.f32.mxu0 0.0
      %570 = vmatmul.mubr.f32.gmra.mxu0 %v376
      %v571 = vpop.f32.mrf.mxu0
      %v572 = vadd.f32 %v321, %v571
      %v573 = vpop.f32.mrf.mxu0
      %574 = vmatprep.mubr.f32.mxu0 0.0
      %575 = vmatmul.mubr.f32.gmra.mxu0 %v379
      %v576 = vpop.f32.mrf.mxu0
      %v577 = vadd.f32 %v321, %v576
      %v578 = vpop.f32.mrf.mxu0
      %579 = vmatprep.mubr.f32.mxu0 0.0
      %580 = vmatmul.mubr.f32.gmra.mxu0 %v382
      %v581 = vpop.f32.mrf.mxu0
      %v582 = vadd.f32 %v321, %v581
      %v583 = vpop.f32.mrf.mxu0
      %584 = vmatprep.mubr.f32.mxu0 0.0
      %585 = vmatmul.mubr.f32.gmra.mxu0 %v385
      %v586 = vpop.f32.mrf.mxu0
      %v587 = vadd.f32 %v321, %v586
      %v588 = vpop.f32.mrf.mxu0
      %589 = vmatprep.mubr.f32.mxu0 0.0
      %590 = vmatmul.mubr.f32.gmra.mxu0 %v388
      %v591 = vpop.f32.mrf.mxu0
      %v592 = vadd.f32 %v321, %v591
      %v593 = vpop.f32.mrf.mxu0
      %594 = vmatprep.mubr.f32.mxu0 0.0
      %595 = vmatmul.mubr.f32.gmra.mxu0 %v391
      %v596 = vpop.f32.mrf.mxu0
      %v597 = vadd.f32 %v321, %v596
      %v598 = vpop.f32.mrf.mxu0
      %599 = vmatprep.mubr.f32.mxu0 0.0
      %600 = vmatmul.mubr.f32.gmra.mxu0 %v394
      %v601 = vpop.f32.mrf.mxu0
      %v602 = vadd.f32 %v321, %v601
      %v603 = vpop.f32.mrf.mxu0
      %604 = vmatprep.mubr.f32.mxu0 0.0
      %605 = vmatmul.mubr.f32.gmra.mxu0 %v397
      %v606 = vpop.f32.mrf.mxu0
      %v607 = vadd.f32 %v321, %v606
      %v608 = vpop.f32.mrf.mxu0
      %609 = vmatprep.mubr.f32.mxu0 0.0
      %610 = vmatmul.mubr.f32.gmra.mxu0 %v400
      %v611 = vpop.f32.mrf.mxu0
      %v612 = vadd.f32 %v321, %v611
      %v613 = vpop.f32.mrf.mxu0
      %614 = vmatprep.mubr.f32.mxu0 0.0
      %615 = vmatmul.mubr.f32.gmra.mxu0 %v403
      %v616 = vpop.f32.mrf.mxu0
      %v617 = vadd.f32 %v321, %v616
      %v618 = vpop.f32.mrf.mxu0
      %619 = vmatprep.mubr.f32.mxu0 0.0
      %620 = vmatmul.mubr.f32.gmra.mxu0 %v406
      %v621 = vpop.f32.mrf.mxu0
      %v622 = vadd.f32 %v321, %v621
      %v623 = vpop.f32.mrf.mxu0
      %624 = vmatprep.mubr.f32.mxu0 0.0
      %625 = vmatmul.mubr.f32.gmra.mxu0 %v409
      %v626 = vpop.f32.mrf.mxu0
      %v627 = vadd.f32 %v321, %v626
      %v628 = vpop.f32.mrf.mxu0
      %629 = vmatprep.mubr.f32.mxu0 0.0
      %630 = vmatmul.mubr.f32.gmra.mxu0 %v412
      %v631 = vpop.f32.mrf.mxu0
      %v632 = vadd.f32 %v321, %v631
      %v633 = vpop.f32.mrf.mxu0
      %634 = vmatprep.mubr.f32.mxu0 0.0
      %635 = vmatmul.mubr.f32.gmra.mxu0 %v415
      %v636 = vpop.f32.mrf.mxu0
      %v637 = vadd.f32 %v321, %v636
      %v638 = vpop.f32.mrf.mxu0
      %639 = vmatprep.mubr.f32.mxu0 0.0
      %640 = vmatmul.mubr.f32.gmra.mxu0 %v418
      %v641 = vpop.f32.mrf.mxu0
      %v642 = vadd.f32 %v321, %v641
      %v643 = vpop.f32.mrf.mxu0
      %644 = vdwg.mxu0
      %v645 = vmax.f32 %v487, 0.0
      %v646 = vmax.f32 %v492, 0.0
      %v647 = vmax.f32 %v497, 0.0
      %v648 = vmax.f32 %v502, 0.0
      %v649 = vmax.f32 %v507, 0.0
      %v650 = vmax.f32 %v512, 0.0
      %v651 = vmax.f32 %v517, 0.0
      %v652 = vmax.f32 %v522, 0.0
      %v653 = vmax.f32 %v527, 0.0
      %v654 = vmax.f32 %v532, 0.0
      %v655 = vmax.f32 %v537, 0.0
      %v656 = vmax.f32 %v542, 0.0
      %v657 = vmax.f32 %v547, 0.0
      %v658 = vmax.f32 %v552, 0.0
      %v659 = vmax.f32 %v557, 0.0
      %v660 = vmax.f32 %v562, 0.0
      %v661 = vmax.f32 %v567, 0.0
      %v662 = vmax.f32 %v572, 0.0
      %v663 = vmax.f32 %v577, 0.0
      %v664 = vmax.f32 %v582, 0.0
      %v665 = vmax.f32 %v587, 0.0
      %v666 = vmax.f32 %v592, 0.0
      %v667 = vmax.f32 %v597, 0.0
      %v668 = vmax.f32 %v602, 0.0
      %v669 = vmax.f32 %v607, 0.0
      %v670 = vmax.f32 %v612, 0.0
      %v671 = vmax.f32 %v617, 0.0
      %v672 = vmax.f32 %v622, 0.0
      %v673 = vmax.f32 %v627, 0.0
      %v674 = vmax.f32 %v632, 0.0
      %v675 = vmax.f32 %v637, 0.0
      %v676 = vmax.f32 %v642, 0.0
      %v677 = vld [vmem:[%s3] sm:$0xff]
      %v678 = vld [vmem:[%s3 + $0x8] sm:$0xff]
      %v679 = vld [vmem:[%s3 + $0x10] sm:$0xff]
      %v680 = vld [vmem:[%s3 + $0x18] sm:$0xff]
      %v681 = vld [vmem:[%s3 + $0x20] sm:$0xff]
      %v682 = vld [vmem:[%s3 + $0x28] sm:$0xff]
      %v683 = vld [vmem:[%s3 + $0x30] sm:$0xff]
      %v684 = vld [vmem:[%s3 + $0x38] sm:$0xff]
      %v685 = vld [vmem:[%s4] sm:$0x1]
      %v687 = vlaneseq
      %v688 = vshrl.u32 %v687, 7
      %v689 = vsub.s32 0, %v688
      %v690 = vrot.slane %v685, %v689
      %vm692 = vcmask 523264
      %v694 = vsel %vm692, %v645, 0
      %v697 = vsel %vm692, %v646, 0
      %v700 = vsel %vm692, %v647, 0
      %v703 = vsel %vm692, %v648, 0
      %v706 = vsel %vm692, %v649, 0
      %v709 = vsel %vm692, %v650, 0
      %v712 = vsel %vm692, %v651, 0
      %v715 = vsel %vm692, %v652, 0
      %v718 = vsel %vm692, %v653, 0
      %v721 = vsel %vm692, %v654, 0
      %v724 = vsel %vm692, %v655, 0
      %v727 = vsel %vm692, %v656, 0
      %v730 = vsel %vm692, %v657, 0
      %v733 = vsel %vm692, %v658, 0
      %v736 = vsel %vm692, %v659, 0
      %v739 = vsel %vm692, %v660, 0
      %v742 = vsel %vm692, %v661, 0
      %v745 = vsel %vm692, %v662, 0
      %v748 = vsel %vm692, %v663, 0
      %v751 = vsel %vm692, %v664, 0
      %v754 = vsel %vm692, %v665, 0
      %v757 = vsel %vm692, %v666, 0
      %v760 = vsel %vm692, %v667, 0
      %v763 = vsel %vm692, %v668, 0
      %v766 = vsel %vm692, %v669, 0
      %v769 = vsel %vm692, %v670, 0
      %v772 = vsel %vm692, %v671, 0
      %v775 = vsel %vm692, %v672, 0
      %v778 = vsel %vm692, %v673, 0
      %v781 = vsel %vm692, %v674, 0
      %v784 = vsel %vm692, %v675, 0
      %v787 = vsel %vm692, %v676, 0
      %789 = vmatprep.subr.mxu0 0.0
      %790 = vmatpush1.msra.mxu0 0.0
      %791 = vmatprep.subr.mxu0 0.0
      %792 = vmatpush1.msra.mxu0 0.0
      %793 = vmatprep.subr.mxu0 0.0
      %794 = vmatpush1.msra.mxu0 0.0
      %795 = vmatprep.subr.mxu0 0.0
      %796 = vmatpush1.msra.mxu0 0.0
      %797 = vmatprep.subr.mxu0 0.0
      %798 = vmatpush1.msra.mxu0 0.0
      %799 = vmatprep.subr.mxu0 0.0
      %800 = vmatpush1.msra.mxu0 0.0
      %801 = vmatprep.subr.mxu0 0.0
      %802 = vmatpush1.msra.mxu0 0.0
      %803 = vmatprep.subr.mxu0 0.0
      %804 = vmatpush1.msra.mxu0 0.0
      %805 = vmatprep.subr.mxu0 0.0
      %806 = vmatpush1.msra.mxu0 %v684
      %807 = vmatprep.subr.mxu0 0.0
      %808 = vmatpush1.msra.mxu0 %v683
      %809 = vmatprep.subr.mxu0 0.0
      %810 = vmatpush1.msra.mxu0 %v682
      %811 = vmatprep.subr.mxu0 0.0
      %812 = vmatpush1.msra.mxu0 %v681
      %813 = vmatprep.subr.mxu0 0.0
      %814 = vmatpush1.msra.mxu0 %v680
      %815 = vmatprep.subr.mxu0 0.0
      %816 = vmatpush1.msra.mxu0 %v679
      %817 = vmatprep.subr.mxu0 0.0
      %818 = vmatpush1.msra.mxu0 %v678
      %819 = vmatprep.subr.mxu0 0.0
      %820 = vmatpush1.msra.mxu0 %v677
      %821 = vmatprep.subr.mxu0 0.0
      %822 = vmatpush2.msra.mxu0 0.0
      %823 = vmatprep.subr.mxu0 0.0
      %824 = vmatpush2.msra.mxu0 0.0
      %825 = vmatprep.subr.mxu0 0.0
      %826 = vmatpush2.msra.mxu0 0.0
      %827 = vmatprep.subr.mxu0 0.0
      %828 = vmatpush2.msra.mxu0 0.0
      %829 = vmatprep.subr.mxu0 0.0
      %830 = vmatpush2.msra.mxu0 0.0
      %831 = vmatprep.subr.mxu0 0.0
      %832 = vmatpush2.msra.mxu0 0.0
      %833 = vmatprep.subr.mxu0 0.0
      %834 = vmatpush2.msra.mxu0 0.0
      %835 = vmatprep.subr.mxu0 0.0
      %836 = vmatpush2.msra.mxu0 0.0
      %837 = vmatprep.subr.mxu0 0.0
      %838 = vmatpush2.msra.mxu0 0.0
      %839 = vmatprep.subr.mxu0 0.0
      %840 = vmatpush2.msra.mxu0 0.0
      %841 = vmatprep.subr.mxu0 0.0
      %842 = vmatpush2.msra.mxu0 0.0
      %843 = vmatprep.subr.mxu0 0.0
      %844 = vmatpush2.msra.mxu0 0.0
      %845 = vmatprep.subr.mxu0 0.0
      %846 = vmatpush2.msra.mxu0 0.0
      %847 = vmatprep.subr.mxu0 0.0
      %848 = vmatpush2.msra.mxu0 0.0
      %849 = vmatprep.subr.mxu0 0.0
      %850 = vmatpush2.msra.mxu0 0.0
      %851 = vmatprep.subr.mxu0 0.0
      %852 = vmatpush2.msra.mxu0 0.0
      %853 = vmatprep.mubr.f32.mxu0 0.0
      %854 = vmatmul.mubr.f32.gmra.mxu0 %v694
      %v855 = vpop.f32.mrf.mxu0
      %v856 = vadd.f32 %v690, %v855
      %v857 = vpop.f32.mrf.mxu0
      %858 = vmatprep.mubr.f32.mxu0 0.0
      %859 = vmatmul.mubr.f32.gmra.mxu0 %v697
      %v860 = vpop.f32.mrf.mxu0
      %v861 = vadd.f32 %v690, %v860
      %v862 = vpop.f32.mrf.mxu0
      %863 = vmatprep.mubr.f32.mxu0 0.0
      %864 = vmatmul.mubr.f32.gmra.mxu0 %v700
      %v865 = vpop.f32.mrf.mxu0
      %v866 = vadd.f32 %v690, %v865
      %v867 = vpop.f32.mrf.mxu0
      %868 = vmatprep.mubr.f32.mxu0 0.0
      %869 = vmatmul.mubr.f32.gmra.mxu0 %v703
      %v870 = vpop.f32.mrf.mxu0
      %v871 = vadd.f32 %v690, %v870
      %v872 = vpop.f32.mrf.mxu0
      %873 = vmatprep.mubr.f32.mxu0 0.0
      %874 = vmatmul.mubr.f32.gmra.mxu0 %v706
      %v875 = vpop.f32.mrf.mxu0
      %v876 = vadd.f32 %v690, %v875
      %v877 = vpop.f32.mrf.mxu0
      %878 = vmatprep.mubr.f32.mxu0 0.0
      %879 = vmatmul.mubr.f32.gmra.mxu0 %v709
      %v880 = vpop.f32.mrf.mxu0
      %v881 = vadd.f32 %v690, %v880
      %v882 = vpop.f32.mrf.mxu0
      %883 = vmatprep.mubr.f32.mxu0 0.0
      %884 = vmatmul.mubr.f32.gmra.mxu0 %v712
      %v885 = vpop.f32.mrf.mxu0
      %v886 = vadd.f32 %v690, %v885
      %v887 = vpop.f32.mrf.mxu0
      %888 = vmatprep.mubr.f32.mxu0 0.0
      %889 = vmatmul.mubr.f32.gmra.mxu0 %v715
      %v890 = vpop.f32.mrf.mxu0
      %v891 = vadd.f32 %v690, %v890
      %v892 = vpop.f32.mrf.mxu0
      %893 = vmatprep.mubr.f32.mxu0 0.0
      %894 = vmatmul.mubr.f32.gmra.mxu0 %v718
      %v895 = vpop.f32.mrf.mxu0
      %v896 = vadd.f32 %v690, %v895
      %v897 = vpop.f32.mrf.mxu0
      %898 = vmatprep.mubr.f32.mxu0 0.0
      %899 = vmatmul.mubr.f32.gmra.mxu0 %v721
      %v900 = vpop.f32.mrf.mxu0
      %v901 = vadd.f32 %v690, %v900
      %v902 = vpop.f32.mrf.mxu0
      %903 = vmatprep.mubr.f32.mxu0 0.0
      %904 = vmatmul.mubr.f32.gmra.mxu0 %v724
      %v905 = vpop.f32.mrf.mxu0
      %v906 = vadd.f32 %v690, %v905
      %v907 = vpop.f32.mrf.mxu0
      %908 = vmatprep.mubr.f32.mxu0 0.0
      %909 = vmatmul.mubr.f32.gmra.mxu0 %v727
      %v910 = vpop.f32.mrf.mxu0
      %v911 = vadd.f32 %v690, %v910
      %v912 = vpop.f32.mrf.mxu0
      %913 = vmatprep.mubr.f32.mxu0 0.0
      %914 = vmatmul.mubr.f32.gmra.mxu0 %v730
      %v915 = vpop.f32.mrf.mxu0
      %v916 = vadd.f32 %v690, %v915
      %v917 = vpop.f32.mrf.mxu0
      %918 = vmatprep.mubr.f32.mxu0 0.0
      %919 = vmatmul.mubr.f32.gmra.mxu0 %v733
      %v920 = vpop.f32.mrf.mxu0
      %v921 = vadd.f32 %v690, %v920
      %v922 = vpop.f32.mrf.mxu0
      %923 = vmatprep.mubr.f32.mxu0 0.0
      %924 = vmatmul.mubr.f32.gmra.mxu0 %v736
      %v925 = vpop.f32.mrf.mxu0
      %v926 = vadd.f32 %v690, %v925
      %v927 = vpop.f32.mrf.mxu0
      %928 = vmatprep.mubr.f32.mxu0 0.0
      %929 = vmatmul.mubr.f32.gmra.mxu0 %v739
      %v930 = vpop.f32.mrf.mxu0
      %v931 = vadd.f32 %v690, %v930
      %v932 = vpop.f32.mrf.mxu0
      %933 = vmatprep.mubr.f32.mxu0 0.0
      %934 = vmatmul.mubr.f32.gmra.mxu0 %v742
      %v935 = vpop.f32.mrf.mxu0
      %v936 = vadd.f32 %v690, %v935
      %v937 = vpop.f32.mrf.mxu0
      %938 = vmatprep.mubr.f32.mxu0 0.0
      %939 = vmatmul.mubr.f32.gmra.mxu0 %v745
      %v940 = vpop.f32.mrf.mxu0
      %v941 = vadd.f32 %v690, %v940
      %v942 = vpop.f32.mrf.mxu0
      %943 = vmatprep.mubr.f32.mxu0 0.0
      %944 = vmatmul.mubr.f32.gmra.mxu0 %v748
      %v945 = vpop.f32.mrf.mxu0
      %v946 = vadd.f32 %v690, %v945
      %v947 = vpop.f32.mrf.mxu0
      %948 = vmatprep.mubr.f32.mxu0 0.0
      %949 = vmatmul.mubr.f32.gmra.mxu0 %v751
      %v950 = vpop.f32.mrf.mxu0
      %v951 = vadd.f32 %v690, %v950
      %v952 = vpop.f32.mrf.mxu0
      %953 = vmatprep.mubr.f32.mxu0 0.0
      %954 = vmatmul.mubr.f32.gmra.mxu0 %v754
      %v955 = vpop.f32.mrf.mxu0
      %v956 = vadd.f32 %v690, %v955
      %v957 = vpop.f32.mrf.mxu0
      %958 = vmatprep.mubr.f32.mxu0 0.0
      %959 = vmatmul.mubr.f32.gmra.mxu0 %v757
      %v960 = vpop.f32.mrf.mxu0
      %v961 = vadd.f32 %v690, %v960
      %v962 = vpop.f32.mrf.mxu0
      %963 = vmatprep.mubr.f32.mxu0 0.0
      %964 = vmatmul.mubr.f32.gmra.mxu0 %v760
      %v965 = vpop.f32.mrf.mxu0
      %v966 = vadd.f32 %v690, %v965
      %v967 = vpop.f32.mrf.mxu0
      %968 = vmatprep.mubr.f32.mxu0 0.0
      %969 = vmatmul.mubr.f32.gmra.mxu0 %v763
      %v970 = vpop.f32.mrf.mxu0
      %v971 = vadd.f32 %v690, %v970
      %v972 = vpop.f32.mrf.mxu0
      %973 = vmatprep.mubr.f32.mxu0 0.0
      %974 = vmatmul.mubr.f32.gmra.mxu0 %v766
      %v975 = vpop.f32.mrf.mxu0
      %v976 = vadd.f32 %v690, %v975
      %v977 = vpop.f32.mrf.mxu0
      %978 = vmatprep.mubr.f32.mxu0 0.0
      %979 = vmatmul.mubr.f32.gmra.mxu0 %v769
      %v980 = vpop.f32.mrf.mxu0
      %v981 = vadd.f32 %v690, %v980
      %v982 = vpop.f32.mrf.mxu0
      %983 = vmatprep.mubr.f32.mxu0 0.0
      %984 = vmatmul.mubr.f32.gmra.mxu0 %v772
      %v985 = vpop.f32.mrf.mxu0
      %v986 = vadd.f32 %v690, %v985
      %v987 = vpop.f32.mrf.mxu0
      %988 = vmatprep.mubr.f32.mxu0 0.0
      %989 = vmatmul.mubr.f32.gmra.mxu0 %v775
      %v990 = vpop.f32.mrf.mxu0
      %v991 = vadd.f32 %v690, %v990
      %v992 = vpop.f32.mrf.mxu0
      %993 = vmatprep.mubr.f32.mxu0 0.0
      %994 = vmatmul.mubr.f32.gmra.mxu0 %v778
      %v995 = vpop.f32.mrf.mxu0
      %v996 = vadd.f32 %v690, %v995
      %v997 = vpop.f32.mrf.mxu0
      %998 = vmatprep.mubr.f32.mxu0 0.0
      %999 = vmatmul.mubr.f32.gmra.mxu0 %v781
      %v1000 = vpop.f32.mrf.mxu0
      %v1001 = vadd.f32 %v690, %v1000
      %v1002 = vpop.f32.mrf.mxu0
      %1003 = vmatprep.mubr.f32.mxu0 0.0
      %1004 = vmatmul.mubr.f32.gmra.mxu0 %v784
      %v1005 = vpop.f32.mrf.mxu0
      %v1006 = vadd.f32 %v690, %v1005
      %v1007 = vpop.f32.mrf.mxu0
      %1008 = vmatprep.mubr.f32.mxu0 0.0
      %1009 = vmatmul.mubr.f32.gmra.mxu0 %v787
      %v1010 = vpop.f32.mrf.mxu0
      %v1011 = vadd.f32 %v690, %v1010
      %v1012 = vpop.f32.mrf.mxu0
      %1013 = vdwg.mxu0
      %v1014 = vmax.f32 %v856, 0.0
      %v1015 = vmax.f32 %v861, 0.0
      %v1016 = vmax.f32 %v866, 0.0
      %v1017 = vmax.f32 %v871, 0.0
      %v1018 = vmax.f32 %v876, 0.0
      %v1019 = vmax.f32 %v881, 0.0
      %v1020 = vmax.f32 %v886, 0.0
      %v1021 = vmax.f32 %v891, 0.0
      %v1022 = vmax.f32 %v896, 0.0
      %v1023 = vmax.f32 %v901, 0.0
      %v1024 = vmax.f32 %v906, 0.0
      %v1025 = vmax.f32 %v911, 0.0
      %v1026 = vmax.f32 %v916, 0.0
      %v1027 = vmax.f32 %v921, 0.0
      %v1028 = vmax.f32 %v926, 0.0
      %v1029 = vmax.f32 %v931, 0.0
      %v1030 = vmax.f32 %v936, 0.0
      %v1031 = vmax.f32 %v941, 0.0
      %v1032 = vmax.f32 %v946, 0.0
      %v1033 = vmax.f32 %v951, 0.0
      %v1034 = vmax.f32 %v956, 0.0
      %v1035 = vmax.f32 %v961, 0.0
      %v1036 = vmax.f32 %v966, 0.0
      %v1037 = vmax.f32 %v971, 0.0
      %v1038 = vmax.f32 %v976, 0.0
      %v1039 = vmax.f32 %v981, 0.0
      %v1040 = vmax.f32 %v986, 0.0
      %v1041 = vmax.f32 %v991, 0.0
      %v1042 = vmax.f32 %v996, 0.0
      %v1043 = vmax.f32 %v1001, 0.0
      %v1044 = vmax.f32 %v1006, 0.0
      %v1045 = vmax.f32 %v1011, 0.0
      %v1046 = vld [vmem:[%s5] sm:$0xff]
      %v1047 = vld [vmem:[%s5 + $0x8] sm:$0xff]
      %v1048 = vld [vmem:[%s5 + $0x10] sm:$0xff]
      %v1049 = vld [vmem:[%s5 + $0x18] sm:$0xff]
      %v1050 = vld [vmem:[%s5 + $0x20] sm:$0xff]
      %v1051 = vld [vmem:[%s5 + $0x28] sm:$0xff]
      %v1052 = vld [vmem:[%s5 + $0x30] sm:$0xff]
      %v1053 = vld [vmem:[%s5 + $0x38] sm:$0xff]
      %v1054 = vld [vmem:[%s6] sm:$0x1]
      %v1056 = vlaneseq
      %v1057 = vshrl.u32 %v1056, 7
      %v1058 = vsub.s32 0, %v1057
      %v1059 = vrot.slane %v1054, %v1058
      %v1062 = vsel %vm692, %v1014, 0
      %v1065 = vsel %vm692, %v1015, 0
      %v1068 = vsel %vm692, %v1016, 0
      %v1071 = vsel %vm692, %v1017, 0
      %v1074 = vsel %vm692, %v1018, 0
      %v1077 = vsel %vm692, %v1019, 0
      %v1080 = vsel %vm692, %v1020, 0
      %v1083 = vsel %vm692, %v1021, 0
      %v1086 = vsel %vm692, %v1022, 0
      %v1089 = vsel %vm692, %v1023, 0
      %v1092 = vsel %vm692, %v1024, 0
      %v1095 = vsel %vm692, %v1025, 0
      %v1098 = vsel %vm692, %v1026, 0
      %v1101 = vsel %vm692, %v1027, 0
      %v1104 = vsel %vm692, %v1028, 0
      %v1107 = vsel %vm692, %v1029, 0
      %v1110 = vsel %vm692, %v1030, 0
      %v1113 = vsel %vm692, %v1031, 0
      %v1116 = vsel %vm692, %v1032, 0
      %v1119 = vsel %vm692, %v1033, 0
      %v1122 = vsel %vm692, %v1034, 0
      %v1125 = vsel %vm692, %v1035, 0
      %v1128 = vsel %vm692, %v1036, 0
      %v1131 = vsel %vm692, %v1037, 0
      %v1134 = vsel %vm692, %v1038, 0
      %v1137 = vsel %vm692, %v1039, 0
      %v1140 = vsel %vm692, %v1040, 0
      %v1143 = vsel %vm692, %v1041, 0
      %v1146 = vsel %vm692, %v1042, 0
      %v1149 = vsel %vm692, %v1043, 0
      %v1152 = vsel %vm692, %v1044, 0
      %v1155 = vsel %vm692, %v1045, 0
      %1157 = vmatprep.subr.mxu0 0.0
      %1158 = vmatpush1.msra.mxu0 0.0
      %1159 = vmatprep.subr.mxu0 0.0
      %1160 = vmatpush1.msra.mxu0 0.0
      %1161 = vmatprep.subr.mxu0 0.0
      %1162 = vmatpush1.msra.mxu0 0.0
      %1163 = vmatprep.subr.mxu0 0.0
      %1164 = vmatpush1.msra.mxu0 0.0
      %1165 = vmatprep.subr.mxu0 0.0
      %1166 = vmatpush1.msra.mxu0 0.0
      %1167 = vmatprep.subr.mxu0 0.0
      %1168 = vmatpush1.msra.mxu0 0.0
      %1169 = vmatprep.subr.mxu0 0.0
      %1170 = vmatpush1.msra.mxu0 0.0
      %1171 = vmatprep.subr.mxu0 0.0
      %1172 = vmatpush1.msra.mxu0 0.0
      %1173 = vmatprep.subr.mxu0 0.0
      %1174 = vmatpush1.msra.mxu0 %v1053
      %1175 = vmatprep.subr.mxu0 0.0
      %1176 = vmatpush1.msra.mxu0 %v1052
      %1177 = vmatprep.subr.mxu0 0.0
      %1178 = vmatpush1.msra.mxu0 %v1051
      %1179 = vmatprep.subr.mxu0 0.0
      %1180 = vmatpush1.msra.mxu0 %v1050
      %1181 = vmatprep.subr.mxu0 0.0
      %1182 = vmatpush1.msra.mxu0 %v1049
      %1183 = vmatprep.subr.mxu0 0.0
      %1184 = vmatpush1.msra.mxu0 %v1048
      %1185 = vmatprep.subr.mxu0 0.0
      %1186 = vmatpush1.msra.mxu0 %v1047
      %1187 = vmatprep.subr.mxu0 0.0
      %1188 = vmatpush1.msra.mxu0 %v1046
      %1189 = vmatprep.subr.mxu0 0.0
      %1190 = vmatpush2.msra.mxu0 0.0
      %1191 = vmatprep.subr.mxu0 0.0
      %1192 = vmatpush2.msra.mxu0 0.0
      %1193 = vmatprep.subr.mxu0 0.0
      %1194 = vmatpush2.msra.mxu0 0.0
      %1195 = vmatprep.subr.mxu0 0.0
      %1196 = vmatpush2.msra.mxu0 0.0
      %1197 = vmatprep.subr.mxu0 0.0
      %1198 = vmatpush2.msra.mxu0 0.0
      %1199 = vmatprep.subr.mxu0 0.0
      %1200 = vmatpush2.msra.mxu0 0.0
      %1201 = vmatprep.subr.mxu0 0.0
      %1202 = vmatpush2.msra.mxu0 0.0
      %1203 = vmatprep.subr.mxu0 0.0
      %1204 = vmatpush2.msra.mxu0 0.0
      %1205 = vmatprep.subr.mxu0 0.0
      %1206 = vmatpush2.msra.mxu0 0.0
      %1207 = vmatprep.subr.mxu0 0.0
      %1208 = vmatpush2.msra.mxu0 0.0
      %1209 = vmatprep.subr.mxu0 0.0
      %1210 = vmatpush2.msra.mxu0 0.0
      %1211 = vmatprep.subr.mxu0 0.0
      %1212 = vmatpush2.msra.mxu0 0.0
      %1213 = vmatprep.subr.mxu0 0.0
      %1214 = vmatpush2.msra.mxu0 0.0
      %1215 = vmatprep.subr.mxu0 0.0
      %1216 = vmatpush2.msra.mxu0 0.0
      %1217 = vmatprep.subr.mxu0 0.0
      %1218 = vmatpush2.msra.mxu0 0.0
      %1219 = vmatprep.subr.mxu0 0.0
      %1220 = vmatpush2.msra.mxu0 0.0
      %1221 = vmatprep.mubr.f32.mxu0 0.0
      %1222 = vmatmul.mubr.f32.gmra.mxu0 %v1062
      %v1223 = vpop.f32.mrf.mxu0
      %v1224 = vadd.f32 %v1059, %v1223
      %v1225 = vpop.f32.mrf.mxu0
      %1226 = vmatprep.mubr.f32.mxu0 0.0
      %1227 = vmatmul.mubr.f32.gmra.mxu0 %v1065
      %v1228 = vpop.f32.mrf.mxu0
      %v1229 = vadd.f32 %v1059, %v1228
      %v1230 = vpop.f32.mrf.mxu0
      %1231 = vmatprep.mubr.f32.mxu0 0.0
      %1232 = vmatmul.mubr.f32.gmra.mxu0 %v1068
      %v1233 = vpop.f32.mrf.mxu0
      %v1234 = vadd.f32 %v1059, %v1233
      %v1235 = vpop.f32.mrf.mxu0
      %1236 = vmatprep.mubr.f32.mxu0 0.0
      %1237 = vmatmul.mubr.f32.gmra.mxu0 %v1071
      %v1238 = vpop.f32.mrf.mxu0
      %v1239 = vadd.f32 %v1059, %v1238
      %v1240 = vpop.f32.mrf.mxu0
      %1241 = vmatprep.mubr.f32.mxu0 0.0
      %1242 = vmatmul.mubr.f32.gmra.mxu0 %v1074
      %v1243 = vpop.f32.mrf.mxu0
      %v1244 = vadd.f32 %v1059, %v1243
      %v1245 = vpop.f32.mrf.mxu0
      %1246 = vmatprep.mubr.f32.mxu0 0.0
      %1247 = vmatmul.mubr.f32.gmra.mxu0 %v1077
      %v1248 = vpop.f32.mrf.mxu0
      %v1249 = vadd.f32 %v1059, %v1248
      %v1250 = vpop.f32.mrf.mxu0
      %1251 = vmatprep.mubr.f32.mxu0 0.0
      %1252 = vmatmul.mubr.f32.gmra.mxu0 %v1080
      %v1253 = vpop.f32.mrf.mxu0
      %v1254 = vadd.f32 %v1059, %v1253
      %v1255 = vpop.f32.mrf.mxu0
      %1256 = vmatprep.mubr.f32.mxu0 0.0
      %1257 = vmatmul.mubr.f32.gmra.mxu0 %v1083
      %v1258 = vpop.f32.mrf.mxu0
      %v1259 = vadd.f32 %v1059, %v1258
      %v1260 = vpop.f32.mrf.mxu0
      %1261 = vmatprep.mubr.f32.mxu0 0.0
      %1262 = vmatmul.mubr.f32.gmra.mxu0 %v1086
      %v1263 = vpop.f32.mrf.mxu0
      %v1264 = vadd.f32 %v1059, %v1263
      %v1265 = vpop.f32.mrf.mxu0
      %1266 = vmatprep.mubr.f32.mxu0 0.0
      %1267 = vmatmul.mubr.f32.gmra.mxu0 %v1089
      %v1268 = vpop.f32.mrf.mxu0
      %v1269 = vadd.f32 %v1059, %v1268
      %v1270 = vpop.f32.mrf.mxu0
      %1271 = vmatprep.mubr.f32.mxu0 0.0
      %1272 = vmatmul.mubr.f32.gmra.mxu0 %v1092
      %v1273 = vpop.f32.mrf.mxu0
      %v1274 = vadd.f32 %v1059, %v1273
      %v1275 = vpop.f32.mrf.mxu0
      %1276 = vmatprep.mubr.f32.mxu0 0.0
      %1277 = vmatmul.mubr.f32.gmra.mxu0 %v1095
      %v1278 = vpop.f32.mrf.mxu0
      %v1279 = vadd.f32 %v1059, %v1278
      %v1280 = vpop.f32.mrf.mxu0
      %1281 = vmatprep.mubr.f32.mxu0 0.0
      %1282 = vmatmul.mubr.f32.gmra.mxu0 %v1098
      %v1283 = vpop.f32.mrf.mxu0
      %v1284 = vadd.f32 %v1059, %v1283
      %v1285 = vpop.f32.mrf.mxu0
      %1286 = vmatprep.mubr.f32.mxu0 0.0
      %1287 = vmatmul.mubr.f32.gmra.mxu0 %v1101
      %v1288 = vpop.f32.mrf.mxu0
      %v1289 = vadd.f32 %v1059, %v1288
      %v1290 = vpop.f32.mrf.mxu0
      %1291 = vmatprep.mubr.f32.mxu0 0.0
      %1292 = vmatmul.mubr.f32.gmra.mxu0 %v1104
      %v1293 = vpop.f32.mrf.mxu0
      %v1294 = vadd.f32 %v1059, %v1293
      %v1295 = vpop.f32.mrf.mxu0
      %1296 = vmatprep.mubr.f32.mxu0 0.0
      %1297 = vmatmul.mubr.f32.gmra.mxu0 %v1107
      %v1298 = vpop.f32.mrf.mxu0
      %v1299 = vadd.f32 %v1059, %v1298
      %v1300 = vpop.f32.mrf.mxu0
      %1301 = vmatprep.mubr.f32.mxu0 0.0
      %1302 = vmatmul.mubr.f32.gmra.mxu0 %v1110
      %v1303 = vpop.f32.mrf.mxu0
      %v1304 = vadd.f32 %v1059, %v1303
      %v1305 = vpop.f32.mrf.mxu0
      %1306 = vmatprep.mubr.f32.mxu0 0.0
      %1307 = vmatmul.mubr.f32.gmra.mxu0 %v1113
      %v1308 = vpop.f32.mrf.mxu0
      %v1309 = vadd.f32 %v1059, %v1308
      %v1310 = vpop.f32.mrf.mxu0
      %1311 = vmatprep.mubr.f32.mxu0 0.0
      %1312 = vmatmul.mubr.f32.gmra.mxu0 %v1116
      %v1313 = vpop.f32.mrf.mxu0
      %v1314 = vadd.f32 %v1059, %v1313
      %v1315 = vpop.f32.mrf.mxu0
      %1316 = vmatprep.mubr.f32.mxu0 0.0
      %1317 = vmatmul.mubr.f32.gmra.mxu0 %v1119
      %v1318 = vpop.f32.mrf.mxu0
      %v1319 = vadd.f32 %v1059, %v1318
      %v1320 = vpop.f32.mrf.mxu0
      %1321 = vmatprep.mubr.f32.mxu0 0.0
      %1322 = vmatmul.mubr.f32.gmra.mxu0 %v1122
      %v1323 = vpop.f32.mrf.mxu0
      %v1324 = vadd.f32 %v1059, %v1323
      %v1325 = vpop.f32.mrf.mxu0
      %1326 = vmatprep.mubr.f32.mxu0 0.0
      %1327 = vmatmul.mubr.f32.gmra.mxu0 %v1125
      %v1328 = vpop.f32.mrf.mxu0
      %v1329 = vadd.f32 %v1059, %v1328
      %v1330 = vpop.f32.mrf.mxu0
      %1331 = vmatprep.mubr.f32.mxu0 0.0
      %1332 = vmatmul.mubr.f32.gmra.mxu0 %v1128
      %v1333 = vpop.f32.mrf.mxu0
      %v1334 = vadd.f32 %v1059, %v1333
      %v1335 = vpop.f32.mrf.mxu0
      %1336 = vmatprep.mubr.f32.mxu0 0.0
      %1337 = vmatmul.mubr.f32.gmra.mxu0 %v1131
      %v1338 = vpop.f32.mrf.mxu0
      %v1339 = vadd.f32 %v1059, %v1338
      %v1340 = vpop.f32.mrf.mxu0
      %1341 = vmatprep.mubr.f32.mxu0 0.0
      %1342 = vmatmul.mubr.f32.gmra.mxu0 %v1134
      %v1343 = vpop.f32.mrf.mxu0
      %v1344 = vadd.f32 %v1059, %v1343
      %v1345 = vpop.f32.mrf.mxu0
      %1346 = vmatprep.mubr.f32.mxu0 0.0
      %1347 = vmatmul.mubr.f32.gmra.mxu0 %v1137
      %v1348 = vpop.f32.mrf.mxu0
      %v1349 = vadd.f32 %v1059, %v1348
      %v1350 = vpop.f32.mrf.mxu0
      %1351 = vmatprep.mubr.f32.mxu0 0.0
      %1352 = vmatmul.mubr.f32.gmra.mxu0 %v1140
      %v1353 = vpop.f32.mrf.mxu0
      %v1354 = vadd.f32 %v1059, %v1353
      %v1355 = vpop.f32.mrf.mxu0
      %1356 = vmatprep.mubr.f32.mxu0 0.0
      %1357 = vmatmul.mubr.f32.gmra.mxu0 %v1143
      %v1358 = vpop.f32.mrf.mxu0
      %v1359 = vadd.f32 %v1059, %v1358
      %v1360 = vpop.f32.mrf.mxu0
      %1361 = vmatprep.mubr.f32.mxu0 0.0
      %1362 = vmatmul.mubr.f32.gmra.mxu0 %v1146
      %v1363 = vpop.f32.mrf.mxu0
      %v1364 = vadd.f32 %v1059, %v1363
      %v1365 = vpop.f32.mrf.mxu0
      %1366 = vmatprep.mubr.f32.mxu0 0.0
      %1367 = vmatmul.mubr.f32.gmra.mxu0 %v1149
      %v1368 = vpop.f32.mrf.mxu0
      %v1369 = vadd.f32 %v1059, %v1368
      %v1370 = vpop.f32.mrf.mxu0
      %1371 = vmatprep.mubr.f32.mxu0 0.0
      %1372 = vmatmul.mubr.f32.gmra.mxu0 %v1152
      %v1373 = vpop.f32.mrf.mxu0
      %v1374 = vadd.f32 %v1059, %v1373
      %v1375 = vpop.f32.mrf.mxu0
      %1376 = vmatprep.mubr.f32.mxu0 0.0
      %1377 = vmatmul.mubr.f32.gmra.mxu0 %v1155
      %v1378 = vpop.f32.mrf.mxu0
      %v1379 = vadd.f32 %v1059, %v1378
      %v1380 = vpop.f32.mrf.mxu0
      %1381 = vdwg.mxu0
      %vm1382 = vcmask 64512
      %1383 = vst.msk [vmem:[%s280] sm:$0xff] %vm1382, %v1224
      %1384 = vst.msk [vmem:[%s280 + $0x8] sm:$0xff] %vm1382, %v1229
      %1385 = vst.msk [vmem:[%s280 + $0x10] sm:$0xff] %vm1382, %v1234
      %1386 = vst.msk [vmem:[%s280 + $0x18] sm:$0xff] %vm1382, %v1239
      %1387 = vst.msk [vmem:[%s280 + $0x20] sm:$0xff] %vm1382, %v1244
      %1388 = vst.msk [vmem:[%s280 + $0x28] sm:$0xff] %vm1382, %v1249
      %1389 = vst.msk [vmem:[%s280 + $0x30] sm:$0xff] %vm1382, %v1254
      %1390 = vst.msk [vmem:[%s280 + $0x38] sm:$0xff] %vm1382, %v1259
      %1391 = vst.msk [vmem:[%s280 + $0x40] sm:$0xff] %vm1382, %v1264
      %1392 = vst.msk [vmem:[%s280 + $0x48] sm:$0xff] %vm1382, %v1269
      %1393 = vst.msk [vmem:[%s280 + $0x50] sm:$0xff] %vm1382, %v1274
      %1394 = vst.msk [vmem:[%s280 + $0x58] sm:$0xff] %vm1382, %v1279
      %1395 = vst.msk [vmem:[%s280 + $0x60] sm:$0xff] %vm1382, %v1284
      %1396 = vst.msk [vmem:[%s280 + $0x68] sm:$0xff] %vm1382, %v1289
      %1397 = vst.msk [vmem:[%s280 + $0x70] sm:$0xff] %vm1382, %v1294
      %1398 = vst.msk [vmem:[%s280 + $0x78] sm:$0xff] %vm1382, %v1299
      %1399 = vst.msk [vmem:[%s280 + $0x80] sm:$0xff] %vm1382, %v1304
      %1400 = vst.msk [vmem:[%s280 + $0x88] sm:$0xff] %vm1382, %v1309
      %1401 = vst.msk [vmem:[%s280 + $0x90] sm:$0xff] %vm1382, %v1314
      %1402 = vst.msk [vmem:[%s280 + $0x98] sm:$0xff] %vm1382, %v1319
      %1403 = vst.msk [vmem:[%s280 + $0xa0] sm:$0xff] %vm1382, %v1324
      %1404 = vst.msk [vmem:[%s280 + $0xa8] sm:$0xff] %vm1382, %v1329
      %1405 = vst.msk [vmem:[%s280 + $0xb0] sm:$0xff] %vm1382, %v1334
      %1406 = vst.msk [vmem:[%s280 + $0xb8] sm:$0xff] %vm1382, %v1339
      %1407 = vst.msk [vmem:[%s280 + $0xc0] sm:$0xff] %vm1382, %v1344
      %1408 = vst.msk [vmem:[%s280 + $0xc8] sm:$0xff] %vm1382, %v1349
      %1409 = vst.msk [vmem:[%s280 + $0xd0] sm:$0xff] %vm1382, %v1354
      %1410 = vst.msk [vmem:[%s280 + $0xd8] sm:$0xff] %vm1382, %v1359
      %1411 = vst.msk [vmem:[%s280 + $0xe0] sm:$0xff] %vm1382, %v1364
      %1412 = vst.msk [vmem:[%s280 + $0xe8] sm:$0xff] %vm1382, %v1369
      %1413 = vst.msk [vmem:[%s280 + $0xf0] sm:$0xff] %vm1382, %v1374
      %1414 = vst.msk [vmem:[%s280 + $0xf8] sm:$0xff] %vm1382, %v1379
      %s1415 = smul.u32 32, %s18
      %p1416 = scmp.lt.s32.totalorder %s1415, 63
      %s1417 = scalar_select %p1416, %s1415, 63
      %s1418 = smul.addr %s1417, 8
      %s1419 = scalar_lea.vmem %s7, %s1418
      // Predicated region
      $region49: #{tpu_custom_call.1} parent=47 // pred_check
        %p1420 = pneg %p188
      $region50: #{tpu_custom_call.1} parent=47 // pred_check_branch
        %1422 = sbr.rel (%p1420) target = $region52
      $region51: #{tpu_custom_call.1} parent=47 // pred_region
        %s1423 = smul.u32 32, %s18
      $region52: #{tpu_custom_call.1} parent=47 // pred_fallthru
        _
    $region48: #{tpu_custom_call.1} parent=5 // pred_fallthru
      _
    %p1424 = scmp.le.s32.totalorder 2, %s13
    // Predicated region
    $region53: #{tpu_custom_call.1} parent=5 // pred_check
      %p1425 = pneg %p1424
    $region54: #{tpu_custom_call.1} parent=5 // pred_check_branch
      %1427 = sbr.rel (%p1425) target = $region56
    $region55: #{tpu_custom_call.1} parent=5 // pred_region
      %s1428 = ssub.s32 %s13, 2
      // Predicated region
      $region57: #{tpu_custom_call.1} parent=55 // pred_check
        %p1429 = pneg %p194
      $region58: #{tpu_custom_call.1} parent=55 // pred_check_branch
        %1431 = sbr.rel (%p1429) target = $region60
      $region59: #{tpu_custom_call.1} parent=55 // pred_region
        %s1432 = smul.u32 32, %s19
        %p1433 = scmp.lt.s32.totalorder %s1432, 63
        %s1434 = scalar_select %p1433, %s1432, 63
        %s1435 = smul.addr %s1434, 8
        %s1436 = scalar_lea.vmem %s7, %s1435
      $region60: #{tpu_custom_call.1} parent=55 // pred_fallthru
        _
    $region56: #{tpu_custom_call.1} parent=5 // pred_fallthru
      _
  $region6: #{tpu_custom_call.1} parent=0 // loop_footer
    %s17 = sadd.s32 1, %s13
  $region7: #{tpu_custom_call.1} parent=0 // loop_footer_branch
    %12 = sbr.rel target = $region3
  $region8: #{tpu_custom_call.1} parent=0 // loop_exit
    _

</llo_original>
